<compile_context>
chip_gen: v6e
topology: v6e:2x2x1
jax: 0.10.0
libtpu: 0.0.40
codegen_flags: <defaults>
</compile_context>

<pallas_src>
import functools

import jax
import jax.numpy as jnp
from jax.experimental import pallas as pl
from jax.experimental.pallas import tpu as pltpu

HIDDEN = (512, 256, 128, 1)   # layer widths fixed by the PyTorch module
NEG_SLOPE = 0.2               # LeakyReLU negative slope


def _round_up(n, m):
    return ((n + m - 1) // m) * m


# ----------------------------------------------------------------------------
# Fused MLP kernel body: one batch tile (TB rows) through all four layers.
# ----------------------------------------------------------------------------
def _mlp_kernel(x_ref,
                w1_ref, b1_ref,
                w2_ref, b2_ref,
                w3_ref, b3_ref,
                w4_ref, b4_ref,
                o_ref):
    def lrelu(v):  # f32 on the VPU
        return jnp.where(v >= 0.0, v, jnp.float32(NEG_SLOPE) * v)

    # x tile arrives already in bf16; MXU dots accumulate in f32.
    h = jnp.dot(x_ref[...], w1_ref[...],
                preferred_element_type=jnp.float32) + b1_ref[...]
    h = lrelu(h)
    h = jnp.dot(h.astype(jnp.bfloat16), w2_ref[...],
                preferred_element_type=jnp.float32) + b2_ref[...]
    h = lrelu(h)
    h = jnp.dot(h.astype(jnp.bfloat16), w3_ref[...],
                preferred_element_type=jnp.float32) + b3_ref[...]
    h = lrelu(h)
    # Final 128 -> 1 layer on the VPU/XLU (mul + lane reduce) — the MXU would
    # use only 1 output column here.  Kept in f32 end-to-end.
    # TODO(synk): output lane-width is 1 -> masked vst; negligible bytes here.
    o_ref[...] = (jnp.sum(h * w4_ref[...], axis=-1, keepdims=True)
                  + b4_ref[...])


# ----------------------------------------------------------------------------
# Wrapper: batch-tiled pallas_call with VMEM-resident weights.
# ----------------------------------------------------------------------------
@functools.partial(jax.jit, static_argnames=())
def id_discriminator_firsthalf(x, params):
    """x: (B, input_dim) float32 -> (B, 1) float32."""
    B, input_dim = x.shape
    d1, d2, d3, d4 = HIDDEN

    # Batch tile: multiple of 256 (fills the v6e/v7x MXU M-dim, also a multiple
    # of 128 for v5e); small batches just pad up to a multiple of 8.
    if B >= 512:
        TB = 512
    elif B >= 256:
        TB = 256
    else:
        TB = _round_up(B, 8)
    B_pad = _round_up(B, TB)
    grid = (B_pad // TB,)

    x_p = x.astype(jnp.bfloat16)
    if B_pad != B:
        x_p = jnp.pad(x_p, ((0, B_pad - B), (0, 0)))

    # Dot operands in bf16 (halves the weight DMA, MXU-native); elementwise
    # path (biases, final layer) stays f32.
    w1 = params["w1"].astype(jnp.bfloat16)
    w2 = params["w2"].astype(jnp.bfloat16)
    w3 = params["w3"].astype(jnp.bfloat16)
    w4_row = params["w4"].reshape(1, d3).astype(jnp.float32)   # (1, 128) for VPU path
    b1 = params["b1"].reshape(1, d1).astype(jnp.float32)
    b2 = params["b2"].reshape(1, d2).astype(jnp.float32)
    b3 = params["b3"].reshape(1, d3).astype(jnp.float32)
    b4 = params["b4"].reshape(1, d4).astype(jnp.float32)

    weights = (w1, b1, w2, b2, w3, b3, w4_row, b4)

    # Derive the VMEM budget from the actual working set (headroom x2, <=32 MiB
    # so the same kernel fits v7x's 64 MiB/TC without retuning).
    w_bytes = sum(int(w.size) * w.dtype.itemsize for w in weights)
    x_tile_bytes = 2 * TB * input_dim * 2          # double-buffered bf16 x tile
    out_tile_bytes = 2 * TB * d4 * 4
    scratch_bytes = TB * (d1 + d2 + d3) * 4 + TB * (d1 + d2) * 2
    vmem_limit = min(max(2 * (w_bytes + x_tile_bytes + out_tile_bytes
                              + scratch_bytes), 8 * 1024 * 1024),
                     32 * 1024 * 1024)

    flops = 2 * B_pad * (input_dim * d1 + d1 * d2 + d2 * d3 + d3 * d4)
    bytes_accessed = (int(x_p.size) * 2 + w_bytes + B_pad * d4 * 4)

    in_specs = [pl.BlockSpec((TB, input_dim), lambda i: (i, 0))]
    # Weights/biases: whole array, constant index_map -> DMA'd once, resident.
    in_specs += [pl.BlockSpec(w.shape, lambda i: (0, 0)) for w in weights]

    out = pl.pallas_call(
        _mlp_kernel,
        out_shape=jax.ShapeDtypeStruct((B_pad, d4), jnp.float32),
        grid=grid,
        in_specs=in_specs,
        out_specs=pl.BlockSpec((TB, d4), lambda i: (i, 0)),
        compiler_params=pltpu.CompilerParams(
            dimension_semantics=("parallel",),
            vmem_limit_bytes=int(vmem_limit)),
        cost_estimate=pl.CostEstimate(
            flops=int(flops), transcendentals=0,
            bytes_accessed=int(bytes_accessed)),
    )(x_p, *weights)

    return out[:B] if B_pad != B else out


# ----------------------------------------------------------------------------
# Deterministic parameter construction (PyTorch nn.Linear-style init).
# Weights are stored (in, out) so the kernel computes x @ W + b directly;
# loading a real PyTorch checkpoint requires transposing each weight.
# ----------------------------------------------------------------------------
def init_params(key, input_dim):
    dims = (input_dim,) + HIDDEN
    params = {}
    ks = jax.random.split(key, 2 * len(HIDDEN))
    for i in range(len(HIDDEN)):
        fan_in, fan_out = dims[i], dims[i + 1]
        bound = 1.0 / jnp.sqrt(jnp.float32(fan_in))
        params[f"w{i+1}"] = jax.random.uniform(
            ks[2 * i], (fan_in, fan_out), jnp.float32, -bound, bound)
        params[f"b{i+1}"] = jax.random.uniform(
            ks[2 * i + 1], (fan_out,), jnp.float32, -bound, bound)
    return params


# Pure-JAX reference matching the kernel's precision (bf16 dot operands,
# f32 accumulation, f32 elementwise path, f32 final layer).
def _ref_forward(x, params):
    def lrelu(v):
        return jnp.where(v >= 0.0, v, NEG_SLOPE * v)
    h = jnp.dot(x.astype(jnp.bfloat16), params["w1"].astype(jnp.bfloat16),
                preferred_element_type=jnp.float32) + params["b1"]
    h = lrelu(h)
    h = jnp.dot(h.astype(jnp.bfloat16), params["w2"].astype(jnp.bfloat16),
                preferred_element_type=jnp.float32) + params["b2"]
    h = lrelu(h)
    h = jnp.dot(h.astype(jnp.bfloat16), params["w3"].astype(jnp.bfloat16),
                preferred_element_type=jnp.float32) + params["b3"]
    h = lrelu(h)
    return jnp.dot(h, params["w4"],
                   preferred_element_type=jnp.float32) + params["b4"]


if __name__ == "__main__":
    key = jax.random.PRNGKey(0)
    k_params, k_x = jax.random.split(key)

    B = 2
    INPUT_DIM = 64
    params = init_params(k_params, INPUT_DIM)
    x = jax.random.normal(k_x, (B, INPUT_DIM), jnp.float32)

    out = id_discriminator_firsthalf(x, params)
    out = jax.block_until_ready(out)

    assert out.shape == (B, 1), out.shape
    assert out.dtype == jnp.float32
    assert bool(jnp.all(jnp.isfinite(out)))

    ref = _ref_forward(x, params)
    assert bool(jnp.allclose(out, ref, rtol=1e-2, atol=1e-2)), (out, ref)

    print("KERNEL_OK")
</pallas_src>

<mosaic_0001>
module attributes {stable_mosaic.version = 11 : i64} {
  func.func @_mlp_kernel(%arg0: i32, %arg1: memref<8x64xbf16, #tpu.memory_space<vmem>>, %arg2: memref<64x512xbf16, #tpu.memory_space<vmem>>, %arg3: memref<1x512xf32, #tpu.memory_space<vmem>>, %arg4: memref<512x256xbf16, #tpu.memory_space<vmem>>, %arg5: memref<1x256xf32, #tpu.memory_space<vmem>>, %arg6: memref<256x128xbf16, #tpu.memory_space<vmem>>, %arg7: memref<1x128xf32, #tpu.memory_space<vmem>>, %arg8: memref<1x128xf32, #tpu.memory_space<vmem>>, %arg9: memref<1x1xf32, #tpu.memory_space<vmem>>, %arg10: memref<8x1xf32, #tpu.memory_space<vmem>>) attributes {dimension_semantics = [#tpu.dimension_semantics<parallel>], iteration_bounds = array<i64: 1>, scalar_prefetch = 0 : i64, scratch_operands = 0 : i64, tpu.core_type = #tpu.core_type<tc>, window_params = [{transform_indices = @transform_0, window_bounds = array<i64: 8, 64>}, {pipeline_mode = #tpu.pipeline_mode<synchronous>, transform_indices = @transform_1, window_bounds = array<i64: 64, 512>}, {pipeline_mode = #tpu.pipeline_mode<synchronous>, transform_indices = @transform_2, window_bounds = array<i64: 1, 512>}, {pipeline_mode = #tpu.pipeline_mode<synchronous>, transform_indices = @transform_3, window_bounds = array<i64: 512, 256>}, {pipeline_mode = #tpu.pipeline_mode<synchronous>, transform_indices = @transform_4, window_bounds = array<i64: 1, 256>}, {pipeline_mode = #tpu.pipeline_mode<synchronous>, transform_indices = @transform_5, window_bounds = array<i64: 256, 128>}, {pipeline_mode = #tpu.pipeline_mode<synchronous>, transform_indices = @transform_6, window_bounds = array<i64: 1, 128>}, {pipeline_mode = #tpu.pipeline_mode<synchronous>, transform_indices = @transform_7, window_bounds = array<i64: 1, 128>}, {pipeline_mode = #tpu.pipeline_mode<synchronous>, transform_indices = @transform_8, window_bounds = array<i64: 1, 1>}, {transform_indices = @transform_9, window_bounds = array<i64: 8, 1>}]} {
    %c0 = arith.constant 0 : index
    %c0_0 = arith.constant 0 : index
    %0 = vector.load %arg1[%c0, %c0_0] : memref<8x64xbf16, #tpu.memory_space<vmem>>, vector<8x64xbf16>
    %c0_1 = arith.constant 0 : index
    %c0_2 = arith.constant 0 : index
    %1 = vector.load %arg2[%c0_1, %c0_2] : memref<64x512xbf16, #tpu.memory_space<vmem>>, vector<64x512xbf16>
    %cst = arith.constant dense<0.000000e+00> : vector<8x512xf32>
    %2 = tpu.matmul %0, %1, %cst {dimension_numbers = #tpu.dot_dimension_numbers<[1], [0], [0], [1], [0, 0, 1, 1], [], []>} : vector<8x64xbf16>, vector<64x512xbf16>, vector<8x512xf32> -> vector<8x512xf32>
    %c0_3 = arith.constant 0 : index
    %c0_4 = arith.constant 0 : index
    %3 = vector.load %arg3[%c0_3, %c0_4] : memref<1x512xf32, #tpu.memory_space<vmem>>, vector<1x512xf32>
    %4 = vector.broadcast %3 : vector<1x512xf32> to vector<8x512xf32>
    %5 = arith.addf %2, %4 : vector<8x512xf32>
    %cst_5 = arith.constant 0.000000e+00 : f32
    %6 = vector.broadcast %cst_5 : f32 to vector<8x512xf32>
    %7 = arith.cmpf oge, %5, %6 : vector<8x512xf32>
    %cst_6 = arith.constant 2.000000e-01 : f32
    %8 = vector.broadcast %cst_6 : f32 to vector<8x512xf32>
    %9 = arith.mulf %8, %5 : vector<8x512xf32>
    %10 = arith.select %7, %5, %9 : vector<8x512xi1>, vector<8x512xf32>
    %11 = arith.truncf %10 : vector<8x512xf32> to vector<8x512xbf16>
    %c0_7 = arith.constant 0 : index
    %c0_8 = arith.constant 0 : index
    %12 = vector.load %arg4[%c0_7, %c0_8] : memref<512x256xbf16, #tpu.memory_space<vmem>>, vector<512x256xbf16>
    %cst_9 = arith.constant dense<0.000000e+00> : vector<8x256xf32>
    %13 = tpu.matmul %11, %12, %cst_9 {dimension_numbers = #tpu.dot_dimension_numbers<[1], [0], [0], [1], [0, 0, 1, 1], [], []>} : vector<8x512xbf16>, vector<512x256xbf16>, vector<8x256xf32> -> vector<8x256xf32>
    %c0_10 = arith.constant 0 : index
    %c0_11 = arith.constant 0 : index
    %14 = vector.load %arg5[%c0_10, %c0_11] : memref<1x256xf32, #tpu.memory_space<vmem>>, vector<1x256xf32>
    %15 = vector.broadcast %14 : vector<1x256xf32> to vector<8x256xf32>
    %16 = arith.addf %13, %15 : vector<8x256xf32>
    %cst_12 = arith.constant 0.000000e+00 : f32
    %17 = vector.broadcast %cst_12 : f32 to vector<8x256xf32>
    %18 = arith.cmpf oge, %16, %17 : vector<8x256xf32>
    %cst_13 = arith.constant 2.000000e-01 : f32
    %19 = vector.broadcast %cst_13 : f32 to vector<8x256xf32>
    %20 = arith.mulf %19, %16 : vector<8x256xf32>
    %21 = arith.select %18, %16, %20 : vector<8x256xi1>, vector<8x256xf32>
    %22 = arith.truncf %21 : vector<8x256xf32> to vector<8x256xbf16>
    %c0_14 = arith.constant 0 : index
    %c0_15 = arith.constant 0 : index
    %23 = vector.load %arg6[%c0_14, %c0_15] : memref<256x128xbf16, #tpu.memory_space<vmem>>, vector<256x128xbf16>
    %cst_16 = arith.constant dense<0.000000e+00> : vector<8x128xf32>
    %24 = tpu.matmul %22, %23, %cst_16 {dimension_numbers = #tpu.dot_dimension_numbers<[1], [0], [0], [1], [0, 0, 1, 1], [], []>} : vector<8x256xbf16>, vector<256x128xbf16>, vector<8x128xf32> -> vector<8x128xf32>
    %c0_17 = arith.constant 0 : index
    %c0_18 = arith.constant 0 : index
    %25 = vector.load %arg7[%c0_17, %c0_18] : memref<1x128xf32, #tpu.memory_space<vmem>>, vector<1x128xf32>
    %26 = vector.broadcast %25 : vector<1x128xf32> to vector<8x128xf32>
    %27 = arith.addf %24, %26 : vector<8x128xf32>
    %cst_19 = arith.constant 0.000000e+00 : f32
    %28 = vector.broadcast %cst_19 : f32 to vector<8x128xf32>
    %29 = arith.cmpf oge, %27, %28 : vector<8x128xf32>
    %cst_20 = arith.constant 2.000000e-01 : f32
    %30 = vector.broadcast %cst_20 : f32 to vector<8x128xf32>
    %31 = arith.mulf %30, %27 : vector<8x128xf32>
    %32 = arith.select %29, %27, %31 : vector<8x128xi1>, vector<8x128xf32>
    %c0_21 = arith.constant 0 : index
    %c0_22 = arith.constant 0 : index
    %33 = vector.load %arg8[%c0_21, %c0_22] : memref<1x128xf32, #tpu.memory_space<vmem>>, vector<1x128xf32>
    %34 = vector.broadcast %33 : vector<1x128xf32> to vector<8x128xf32>
    %35 = arith.mulf %32, %34 : vector<8x128xf32>
    %cst_23 = arith.constant dense<0.000000e+00> : vector<8xf32>
    %36 = vector.multi_reduction <add>, %35, %cst_23 [1] : vector<8x128xf32> to vector<8xf32>
    %37 = vector.shape_cast %36 : vector<8xf32> to vector<8x1xf32>
    %c0_24 = arith.constant 0 : index
    %c0_25 = arith.constant 0 : index
    %38 = vector.load %arg9[%c0_24, %c0_25] : memref<1x1xf32, #tpu.memory_space<vmem>>, vector<1x1xf32>
    %39 = vector.broadcast %38 : vector<1x1xf32> to vector<8x1xf32>
    %40 = arith.addf %37, %39 : vector<8x1xf32>
    %c0_26 = arith.constant 0 : index
    %c0_27 = arith.constant 0 : index
    %41 = vector.load %arg10[%c0_26, %c0_27] : memref<8x1xf32, #tpu.memory_space<vmem>>, vector<8x1xf32>
    tpu.vector_store %arg10[%c0_26, %c0_27], %40 {strides = array<i32>} : memref<8x1xf32, #tpu.memory_space<vmem>>, vector<8x1xf32>,
    return
  }
  func.func @transform_0(%arg0: i32) -> (i32, i32) {
    %c0_i32 = arith.constant 0 : i32
    %c0_i32_0 = arith.constant 0 : i32
    return %arg0, %c0_i32 : i32, i32
  }
  func.func @transform_1(%arg0: i32) -> (i32, i32) {
    %c0_i32 = arith.constant 0 : i32
    %c0_i32_0 = arith.constant 0 : i32
    %c0_i32_1 = arith.constant 0 : i32
    return %c0_i32, %c0_i32_0 : i32, i32
  }
  func.func @transform_2(%arg0: i32) -> (i32, i32) {
    %c0_i32 = arith.constant 0 : i32
    %c0_i32_0 = arith.constant 0 : i32
    %c0_i32_1 = arith.constant 0 : i32
    return %c0_i32, %c0_i32_0 : i32, i32
  }
  func.func @transform_3(%arg0: i32) -> (i32, i32) {
    %c0_i32 = arith.constant 0 : i32
    %c0_i32_0 = arith.constant 0 : i32
    %c0_i32_1 = arith.constant 0 : i32
    return %c0_i32, %c0_i32_0 : i32, i32
  }
  func.func @transform_4(%arg0: i32) -> (i32, i32) {
    %c0_i32 = arith.constant 0 : i32
    %c0_i32_0 = arith.constant 0 : i32
    %c0_i32_1 = arith.constant 0 : i32
    return %c0_i32, %c0_i32_0 : i32, i32
  }
  func.func @transform_5(%arg0: i32) -> (i32, i32) {
    %c0_i32 = arith.constant 0 : i32
    %c0_i32_0 = arith.constant 0 : i32
    %c0_i32_1 = arith.constant 0 : i32
    return %c0_i32, %c0_i32_0 : i32, i32
  }
  func.func @transform_6(%arg0: i32) -> (i32, i32) {
    %c0_i32 = arith.constant 0 : i32
    %c0_i32_0 = arith.constant 0 : i32
    %c0_i32_1 = arith.constant 0 : i32
    return %c0_i32, %c0_i32_0 : i32, i32
  }
  func.func @transform_7(%arg0: i32) -> (i32, i32) {
    %c0_i32 = arith.constant 0 : i32
    %c0_i32_0 = arith.constant 0 : i32
    %c0_i32_1 = arith.constant 0 : i32
    return %c0_i32, %c0_i32_0 : i32, i32
  }
  func.func @transform_8(%arg0: i32) -> (i32, i32) {
    %c0_i32 = arith.constant 0 : i32
    %c0_i32_0 = arith.constant 0 : i32
    %c0_i32_1 = arith.constant 0 : i32
    return %c0_i32, %c0_i32_0 : i32, i32
  }
  func.func @transform_9(%arg0: i32) -> (i32, i32) {
    %c0_i32 = arith.constant 0 : i32
    %c0_i32_0 = arith.constant 0 : i32
    return %arg0, %c0_i32 : i32, i32
  }
}

</mosaic_0001>

<llo_original>
// kernel: id_discriminator_firsthalf.1
$region0: #{id_discriminator_firsthalf.1}
  #allocation0 [shape = 'u32[]', space=smem, size = 0x4, offset = 0x4, fixed_abs, tag = 'smem constant byte address 0x4 - core index']
  #allocation1 [shape = 'u32[144,128]{1,0:T(1,128)}', space=vmem, size = 0x12000, scoped, tag = 'internal scratch']
  #allocation2 [shape = 'f32[1,1]{1,0:T(1,128)S(1)}', space=vmem, size = 0x200, scoped, tag = 'scoped memory for id_discriminator_firsthalf.1']
  %s0 = inlined_call_operand.vmem [shape: bf16[8,64], index: 0, kind: input, shape index: {}]
  %s1 = inlined_call_operand.vmem [shape: bf16[64,512], index: 1, kind: input, shape index: {}]
  %s2 = inlined_call_operand.vmem [shape: f32[1,512], index: 2, kind: input, shape index: {}]
  %s3 = inlined_call_operand.vmem [shape: bf16[512,256], index: 3, kind: input, shape index: {}]
  %s4 = inlined_call_operand.vmem [shape: f32[1,256], index: 4, kind: input, shape index: {}]
  %s5 = inlined_call_operand.vmem [shape: bf16[256,128], index: 5, kind: input, shape index: {}]
  %s6 = inlined_call_operand.vmem [shape: f32[1,128], index: 6, kind: input, shape index: {}]
  %s7 = inlined_call_operand.vmem [shape: f32[1,128], index: 7, kind: input, shape index: {}]
  %s8 = inlined_call_operand.<no memory space> [shape: f32[1,1], index: 8, kind: input, shape index: {}]
  %s9 = inlined_call_operand.vmem [shape: f32[8,1], index: 9, kind: output, shape index: {}]
  %s10 = sld [smem:[#allocation0]]
  $region46: #{id_discriminator_firsthalf.1} parent=0
    _
  %s12 = ssub.s32 1, %s10
  %s13 = scalar_select 0, %s12, %s10
  %v14 = vstv %s8
  %15 = vst [vmem:[#allocation2] sm:$0x1] %v14
  // Predicated region
  $region2: #{id_discriminator_firsthalf.1} parent=0 // pred_check
    _
  $region3: #{id_discriminator_firsthalf.1} parent=0 // pred_check_branch
    %17 = sbr.rel (0) target = $region5
  $region4: #{id_discriminator_firsthalf.1} parent=0 // pred_region
    _
  $region5: #{id_discriminator_firsthalf.1} parent=0 // pred_fallthru
    _
  // Predicated region
  $region6: #{id_discriminator_firsthalf.1} parent=0 // pred_check
    _
  $region7: #{id_discriminator_firsthalf.1} parent=0 // pred_check_branch
    %19 = sbr.rel (0) target = $region9
  $region8: #{id_discriminator_firsthalf.1} parent=0 // pred_region
    _
  $region9: #{id_discriminator_firsthalf.1} parent=0 // pred_fallthru
    _
  // Predicated region
  $region10: #{id_discriminator_firsthalf.1} parent=0 // pred_check
    _
  $region11: #{id_discriminator_firsthalf.1} parent=0 // pred_check_branch
    %21 = sbr.rel (0) target = $region13
  $region12: #{id_discriminator_firsthalf.1} parent=0 // pred_region
    _
  $region13: #{id_discriminator_firsthalf.1} parent=0 // pred_fallthru
    _
  // Predicated region
  $region14: #{id_discriminator_firsthalf.1} parent=0 // pred_check
    _
  $region15: #{id_discriminator_firsthalf.1} parent=0 // pred_check_branch
    %23 = sbr.rel (0) target = $region17
  $region16: #{id_discriminator_firsthalf.1} parent=0 // pred_region
    _
  $region17: #{id_discriminator_firsthalf.1} parent=0 // pred_fallthru
    _
  // Predicated region
  $region18: #{id_discriminator_firsthalf.1} parent=0 // pred_check
    _
  $region19: #{id_discriminator_firsthalf.1} parent=0 // pred_check_branch
    %25 = sbr.rel (0) target = $region21
  $region20: #{id_discriminator_firsthalf.1} parent=0 // pred_region
    _
  $region21: #{id_discriminator_firsthalf.1} parent=0 // pred_fallthru
    _
  // Predicated region
  $region22: #{id_discriminator_firsthalf.1} parent=0 // pred_check
    _
  $region23: #{id_discriminator_firsthalf.1} parent=0 // pred_check_branch
    %27 = sbr.rel (0) target = $region25
  $region24: #{id_discriminator_firsthalf.1} parent=0 // pred_region
    _
  $region25: #{id_discriminator_firsthalf.1} parent=0 // pred_fallthru
    _
  // Predicated region
  $region26: #{id_discriminator_firsthalf.1} parent=0 // pred_check
    _
  $region27: #{id_discriminator_firsthalf.1} parent=0 // pred_check_branch
    %29 = sbr.rel (0) target = $region29
  $region28: #{id_discriminator_firsthalf.1} parent=0 // pred_region
    _
  $region29: #{id_discriminator_firsthalf.1} parent=0 // pred_fallthru
    _
  // Predicated region
  $region30: #{id_discriminator_firsthalf.1} parent=0 // pred_check
    _
  $region31: #{id_discriminator_firsthalf.1} parent=0 // pred_check_branch
    %31 = sbr.rel (0) target = $region33
  $region32: #{id_discriminator_firsthalf.1} parent=0 // pred_region
    _
  $region33: #{id_discriminator_firsthalf.1} parent=0 // pred_fallthru
    _
  // Predicated region
  $region34: #{id_discriminator_firsthalf.1} parent=0 // pred_check
    _
  $region35: #{id_discriminator_firsthalf.1} parent=0 // pred_check_branch
    %33 = sbr.rel (0) target = $region37
  $region36: #{id_discriminator_firsthalf.1} parent=0 // pred_region
    _
  $region37: #{id_discriminator_firsthalf.1} parent=0 // pred_fallthru
    _
  %v35 = vld [vmem:[%s0] sm:$0xf]
  %v36 = vld [vmem:[%s1] sm:$0xff]
  %v37 = vld [vmem:[%s1 + $0x8] sm:$0xff]
  %v38 = vld [vmem:[%s1 + $0x10] sm:$0xff]
  %v39 = vld [vmem:[%s1 + $0x18] sm:$0xff]
  %v40 = vld [vmem:[%s1 + $0x20] sm:$0xff]
  %v41 = vld [vmem:[%s1 + $0x28] sm:$0xff]
  %v42 = vld [vmem:[%s1 + $0x30] sm:$0xff]
  %v43 = vld [vmem:[%s1 + $0x38] sm:$0xff]
  %v44 = vld [vmem:[%s1 + $0x40] sm:$0xff]
  %v45 = vld [vmem:[%s1 + $0x48] sm:$0xff]
  %v46 = vld [vmem:[%s1 + $0x50] sm:$0xff]
  %v47 = vld [vmem:[%s1 + $0x58] sm:$0xff]
  %v48 = vld [vmem:[%s1 + $0x60] sm:$0xff]
  %v49 = vld [vmem:[%s1 + $0x68] sm:$0xff]
  %v50 = vld [vmem:[%s1 + $0x70] sm:$0xff]
  %v51 = vld [vmem:[%s1 + $0x78] sm:$0xff]
  %v52 = vld [vmem:[%s2] sm:$0xf]
  %v54 = vlaneseq
  %v55 = vshrl.u32 %v54, 7
  %v56 = vsub.s32 0, %v55
  %v57 = vrot.slane %v52, %v56
  %v58 = vlaneseq
  %v59 = vshrl.u32 %v58, 7
  %v60 = vsub.s32 1, %v59
  %v61 = vrot.slane %v52, %v60
  %v62 = vlaneseq
  %v63 = vshrl.u32 %v62, 7
  %v64 = vsub.s32 2, %v63
  %v65 = vrot.slane %v52, %v64
  %v66 = vlaneseq
  %v67 = vshrl.u32 %v66, 7
  %v68 = vsub.s32 3, %v67
  %v69 = vrot.slane %v52, %v68
  %v90 = vunpack.c.l.b16 %v36
  %v91 = vunpack.c.h.b16 %v36
  %v92 = vunpack.c.l.b16 %v37
  %v93 = vunpack.c.h.b16 %v37
  %v94 = vunpack.c.l.b16 %v38
  %v95 = vunpack.c.h.b16 %v38
  %v96 = vunpack.c.l.b16 %v39
  %v97 = vunpack.c.h.b16 %v39
  %v98 = vunpack.c.l.b16 %v40
  %v99 = vunpack.c.h.b16 %v40
  %v100 = vunpack.c.l.b16 %v41
  %v101 = vunpack.c.h.b16 %v41
  %v102 = vunpack.c.l.b16 %v42
  %v103 = vunpack.c.h.b16 %v42
  %v104 = vunpack.c.l.b16 %v43
  %v105 = vunpack.c.h.b16 %v43
  %v106 = vunpack.c.l.b16 %v44
  %v107 = vunpack.c.h.b16 %v44
  %v108 = vunpack.c.l.b16 %v45
  %v109 = vunpack.c.h.b16 %v45
  %v110 = vunpack.c.l.b16 %v46
  %v111 = vunpack.c.h.b16 %v46
  %v112 = vunpack.c.l.b16 %v47
  %v113 = vunpack.c.h.b16 %v47
  %v114 = vunpack.c.l.b16 %v48
  %v115 = vunpack.c.h.b16 %v48
  %v116 = vunpack.c.l.b16 %v49
  %v117 = vunpack.c.h.b16 %v49
  %v118 = vunpack.c.l.b16 %v50
  %v119 = vunpack.c.h.b16 %v50
  %v120 = vunpack.c.l.b16 %v51
  %v121 = vunpack.c.h.b16 %v51
  %v122 = vpack.c.b16 %v94, %v90
  %v123 = vpack.c.b16 %v95, %v91
  %v124 = vpack.c.b16 %v96, %v92
  %v125 = vpack.c.b16 %v97, %v93
  %v126 = vpack.c.b16 %v102, %v98
  %v127 = vpack.c.b16 %v103, %v99
  %v128 = vpack.c.b16 %v104, %v100
  %v129 = vpack.c.b16 %v105, %v101
  %v130 = vpack.c.b16 %v110, %v106
  %v131 = vpack.c.b16 %v111, %v107
  %v132 = vpack.c.b16 %v112, %v108
  %v133 = vpack.c.b16 %v113, %v109
  %v134 = vpack.c.b16 %v118, %v114
  %v135 = vpack.c.b16 %v119, %v115
  %v136 = vpack.c.b16 %v120, %v116
  %v137 = vpack.c.b16 %v121, %v117
  %vm154 = vcmask 523264
  %v156 = vsel %vm154, %v35, 0
  %158 = vmatprep.subr.bf16.mxu0 0
  %159 = vmatpush1.bf16.msra.mxu0 0
  %160 = vmatprep.subr.bf16.mxu0 0
  %161 = vmatpush1.bf16.msra.mxu0 0
  %162 = vmatprep.subr.bf16.mxu0 0
  %163 = vmatpush1.bf16.msra.mxu0 0
  %164 = vmatprep.subr.bf16.mxu0 0
  %165 = vmatpush1.bf16.msra.mxu0 0
  %166 = vmatprep.subr.bf16.mxu0 %v135
  %167 = vmatpush1.bf16.msra.mxu0 %v134
  %168 = vmatprep.subr.bf16.mxu0 %v131
  %169 = vmatpush1.bf16.msra.mxu0 %v130
  %170 = vmatprep.subr.bf16.mxu0 %v127
  %171 = vmatpush1.bf16.msra.mxu0 %v126
  %172 = vmatprep.subr.bf16.mxu0 %v123
  %173 = vmatpush1.bf16.msra.mxu0 %v122
  %174 = vmatprep.subr.bf16.mxu0 0
  %175 = vmatpush2.bf16.msra.mxu0 0
  %176 = vmatprep.subr.bf16.mxu0 0
  %177 = vmatpush2.bf16.msra.mxu0 0
  %178 = vmatprep.subr.bf16.mxu0 0
  %179 = vmatpush2.bf16.msra.mxu0 0
  %180 = vmatprep.subr.bf16.mxu0 0
  %181 = vmatpush2.bf16.msra.mxu0 0
  %182 = vmatprep.subr.bf16.mxu0 0
  %183 = vmatpush2.bf16.msra.mxu0 0
  %184 = vmatprep.subr.bf16.mxu0 0
  %185 = vmatpush2.bf16.msra.mxu0 0
  %186 = vmatprep.subr.bf16.mxu0 0
  %187 = vmatpush2.bf16.msra.mxu0 0
  %188 = vmatprep.subr.bf16.mxu0 0
  %189 = vmatpush2.bf16.msra.mxu0 0
  %190 = vmatprep.mubr.bf16.mxu0 0
  %191 = vmatmul.mubr.bf16.gmra.mxu0 %v156
  %v192 = vpop.f32.mrf.mxu0
  %v193 = vadd.f32 %v57, %v192
  %v194 = vpop.f32.mrf.mxu0
  %v195 = vadd.f32 %v61, %v194
  %v196 = vpop.f32.mrf.mxu0
  %v197 = vpop.f32.mrf.mxu0
  %198 = vdwg.mxu0
  %199 = vmatprep.subr.bf16.mxu0 0
  %200 = vmatpush1.bf16.msra.mxu0 0
  %201 = vmatprep.subr.bf16.mxu0 0
  %202 = vmatpush1.bf16.msra.mxu0 0
  %203 = vmatprep.subr.bf16.mxu0 0
  %204 = vmatpush1.bf16.msra.mxu0 0
  %205 = vmatprep.subr.bf16.mxu0 0
  %206 = vmatpush1.bf16.msra.mxu0 0
  %207 = vmatprep.subr.bf16.mxu0 %v137
  %208 = vmatpush1.bf16.msra.mxu0 %v136
  %209 = vmatprep.subr.bf16.mxu0 %v133
  %210 = vmatpush1.bf16.msra.mxu0 %v132
  %211 = vmatprep.subr.bf16.mxu0 %v129
  %212 = vmatpush1.bf16.msra.mxu0 %v128
  %213 = vmatprep.subr.bf16.mxu0 %v125
  %214 = vmatpush1.bf16.msra.mxu0 %v124
  %215 = vmatprep.subr.bf16.mxu0 0
  %216 = vmatpush2.bf16.msra.mxu0 0
  %217 = vmatprep.subr.bf16.mxu0 0
  %218 = vmatpush2.bf16.msra.mxu0 0
  %219 = vmatprep.subr.bf16.mxu0 0
  %220 = vmatpush2.bf16.msra.mxu0 0
  %221 = vmatprep.subr.bf16.mxu0 0
  %222 = vmatpush2.bf16.msra.mxu0 0
  %223 = vmatprep.subr.bf16.mxu0 0
  %224 = vmatpush2.bf16.msra.mxu0 0
  %225 = vmatprep.subr.bf16.mxu0 0
  %226 = vmatpush2.bf16.msra.mxu0 0
  %227 = vmatprep.subr.bf16.mxu0 0
  %228 = vmatpush2.bf16.msra.mxu0 0
  %229 = vmatprep.subr.bf16.mxu0 0
  %230 = vmatpush2.bf16.msra.mxu0 0
  %231 = vmatprep.mubr.bf16.mxu0 0
  %232 = vmatmul.mubr.bf16.gmra.mxu0 %v156
  %v233 = vpop.f32.mrf.mxu0
  %v234 = vadd.f32 %v65, %v233
  %v235 = vpop.f32.mrf.mxu0
  %v236 = vadd.f32 %v69, %v235
  %v237 = vpop.f32.mrf.mxu0
  %v238 = vpop.f32.mrf.mxu0
  %239 = vdwg.mxu0
  %vm240 = vcmp.ge.f32.partialorder %v193, 0.0
  %vm241 = vcmp.ge.f32.partialorder %v195, 0.0
  %vm242 = vcmp.ge.f32.partialorder %v234, 0.0
  %vm243 = vcmp.ge.f32.partialorder %v236, 0.0
  %v244 = vmul.f32 %v193, 0.2
  %v245 = vmul.f32 %v195, 0.2
  %v246 = vmul.f32 %v234, 0.2
  %v247 = vmul.f32 %v236, 0.2
  %v248 = vsel %vm240, %v193, %v244
  %v249 = vsel %vm241, %v195, %v245
  %v250 = vsel %vm242, %v234, %v246
  %v251 = vsel %vm243, %v236, %v247
  %v252 = vpack.c.bf16 %v248, %v248
  %v253 = vpack.c.bf16 %v249, %v249
  %v254 = vpack.c.bf16 %v250, %v250
  %v255 = vpack.c.bf16 %v251, %v251
  %v256 = vld [vmem:[%s3] sm:$0xff]
  %v257 = vld [vmem:[%s3 + $0x8] sm:$0xff]
  %v258 = vld [vmem:[%s3 + $0x10] sm:$0xff]
  %v259 = vld [vmem:[%s3 + $0x18] sm:$0xff]
  %v260 = vld [vmem:[%s3 + $0x20] sm:$0xff]
  %v261 = vld [vmem:[%s3 + $0x28] sm:$0xff]
  %v262 = vld [vmem:[%s3 + $0x30] sm:$0xff]
  %v263 = vld [vmem:[%s3 + $0x38] sm:$0xff]
  %v264 = vld [vmem:[%s3 + $0x40] sm:$0xff]
  %v265 = vld [vmem:[%s3 + $0x48] sm:$0xff]
  %v266 = vld [vmem:[%s3 + $0x50] sm:$0xff]
  %v267 = vld [vmem:[%s3 + $0x58] sm:$0xff]
  %v268 = vld [vmem:[%s3 + $0x60] sm:$0xff]
  %v269 = vld [vmem:[%s3 + $0x68] sm:$0xff]
  %v270 = vld [vmem:[%s3 + $0x70] sm:$0xff]
  %v271 = vld [vmem:[%s3 + $0x78] sm:$0xff]
  %v272 = vld [vmem:[%s3 + $0x80] sm:$0xff]
  %v273 = vld [vmem:[%s3 + $0x88] sm:$0xff]
  %v274 = vld [vmem:[%s3 + $0x90] sm:$0xff]
  %v275 = vld [vmem:[%s3 + $0x98] sm:$0xff]
  %v276 = vld [vmem:[%s3 + $0xa0] sm:$0xff]
  %v277 = vld [vmem:[%s3 + $0xa8] sm:$0xff]
  %v278 = vld [vmem:[%s3 + $0xb0] sm:$0xff]
  %v279 = vld [vmem:[%s3 + $0xb8] sm:$0xff]
  %v280 = vld [vmem:[%s3 + $0xc0] sm:$0xff]
  %v281 = vld [vmem:[%s3 + $0xc8] sm:$0xff]
  %v282 = vld [vmem:[%s3 + $0xd0] sm:$0xff]
  %v283 = vld [vmem:[%s3 + $0xd8] sm:$0xff]
  %v284 = vld [vmem:[%s3 + $0xe0] sm:$0xff]
  %v285 = vld [vmem:[%s3 + $0xe8] sm:$0xff]
  %v286 = vld [vmem:[%s3 + $0xf0] sm:$0xff]
  %v287 = vld [vmem:[%s3 + $0xf8] sm:$0xff]
  %v288 = vld [vmem:[%s3 + $0x100] sm:$0xff]
  %v289 = vld [vmem:[%s3 + $0x108] sm:$0xff]
  %v290 = vld [vmem:[%s3 + $0x110] sm:$0xff]
  %v291 = vld [vmem:[%s3 + $0x118] sm:$0xff]
  %v292 = vld [vmem:[%s3 + $0x120] sm:$0xff]
  %v293 = vld [vmem:[%s3 + $0x128] sm:$0xff]
  %v294 = vld [vmem:[%s3 + $0x130] sm:$0xff]
  %v295 = vld [vmem:[%s3 + $0x138] sm:$0xff]
  %v296 = vld [vmem:[%s3 + $0x140] sm:$0xff]
  %v297 = vld [vmem:[%s3 + $0x148] sm:$0xff]
  %v298 = vld [vmem:[%s3 + $0x150] sm:$0xff]
  %v299 = vld [vmem:[%s3 + $0x158] sm:$0xff]
  %v300 = vld [vmem:[%s3 + $0x160] sm:$0xff]
  %v301 = vld [vmem:[%s3 + $0x168] sm:$0xff]
  %v302 = vld [vmem:[%s3 + $0x170] sm:$0xff]
  %v303 = vld [vmem:[%s3 + $0x178] sm:$0xff]
  %v304 = vld [vmem:[%s3 + $0x180] sm:$0xff]
  %v305 = vld [vmem:[%s3 + $0x188] sm:$0xff]
  %v306 = vld [vmem:[%s3 + $0x190] sm:$0xff]
  %v307 = vld [vmem:[%s3 + $0x198] sm:$0xff]
  %v308 = vld [vmem:[%s3 + $0x1a0] sm:$0xff]
  %v309 = vld [vmem:[%s3 + $0x1a8] sm:$0xff]
  %v310 = vld [vmem:[%s3 + $0x1b0] sm:$0xff]
  %v311 = vld [vmem:[%s3 + $0x1b8] sm:$0xff]
  %v312 = vld [vmem:[%s3 + $0x1c0] sm:$0xff]
  %v313 = vld [vmem:[%s3 + $0x1c8] sm:$0xff]
  %v314 = vld [vmem:[%s3 + $0x1d0] sm:$0xff]
  %v315 = vld [vmem:[%s3 + $0x1d8] sm:$0xff]
  %v316 = vld [vmem:[%s3 + $0x1e0] sm:$0xff]
  %v317 = vld [vmem:[%s3 + $0x1e8] sm:$0xff]
  %v318 = vld [vmem:[%s3 + $0x1f0] sm:$0xff]
  %v319 = vld [vmem:[%s3 + $0x1f8] sm:$0xff]
  %v320 = vld [vmem:[%s4] sm:$0x3]
  %v322 = vlaneseq
  %v323 = vshrl.u32 %v322, 7
  %v324 = vsub.s32 0, %v323
  %v325 = vrot.slane %v320, %v324
  %v326 = vlaneseq
  %v327 = vshrl.u32 %v326, 7
  %v328 = vsub.s32 1, %v327
  %v329 = vrot.slane %v320, %v328
  %v396 = vunpack.c.l.b16 %v256
  %v397 = vunpack.c.h.b16 %v256
  %v398 = vunpack.c.l.b16 %v257
  %v399 = vunpack.c.h.b16 %v257
  %v400 = vunpack.c.l.b16 %v258
  %v401 = vunpack.c.h.b16 %v258
  %v402 = vunpack.c.l.b16 %v259
  %v403 = vunpack.c.h.b16 %v259
  %v404 = vunpack.c.l.b16 %v260
  %v405 = vunpack.c.h.b16 %v260
  %v406 = vunpack.c.l.b16 %v261
  %v407 = vunpack.c.h.b16 %v261
  %v408 = vunpack.c.l.b16 %v262
  %v409 = vunpack.c.h.b16 %v262
  %v410 = vunpack.c.l.b16 %v263
  %v411 = vunpack.c.h.b16 %v263
  %v412 = vunpack.c.l.b16 %v264
  %v413 = vunpack.c.h.b16 %v264
  %v414 = vunpack.c.l.b16 %v265
  %v415 = vunpack.c.h.b16 %v265
  %v416 = vunpack.c.l.b16 %v266
  %v417 = vunpack.c.h.b16 %v266
  %v418 = vunpack.c.l.b16 %v267
  %v419 = vunpack.c.h.b16 %v267
  %v420 = vunpack.c.l.b16 %v268
  %v421 = vunpack.c.h.b16 %v268
  %v422 = vunpack.c.l.b16 %v269
  %v423 = vunpack.c.h.b16 %v269
  %v424 = vunpack.c.l.b16 %v270
  %v425 = vunpack.c.h.b16 %v270
  %v426 = vunpack.c.l.b16 %v271
  %v427 = vunpack.c.h.b16 %v271
  %v428 = vunpack.c.l.b16 %v272
  %v429 = vunpack.c.h.b16 %v272
  %v430 = vunpack.c.l.b16 %v273
  %v431 = vunpack.c.h.b16 %v273
  %v432 = vunpack.c.l.b16 %v274
  %v433 = vunpack.c.h.b16 %v274
  %v434 = vunpack.c.l.b16 %v275
  %v435 = vunpack.c.h.b16 %v275
  %v436 = vunpack.c.l.b16 %v276
  %v437 = vunpack.c.h.b16 %v276
  %v438 = vunpack.c.l.b16 %v277
  %v439 = vunpack.c.h.b16 %v277
  %v440 = vunpack.c.l.b16 %v278
  %v441 = vunpack.c.h.b16 %v278
  %v442 = vunpack.c.l.b16 %v279
  %v443 = vunpack.c.h.b16 %v279
  %v444 = vunpack.c.l.b16 %v280
  %v445 = vunpack.c.h.b16 %v280
  %v446 = vunpack.c.l.b16 %v281
  %v447 = vunpack.c.h.b16 %v281
  %v448 = vunpack.c.l.b16 %v282
  %v449 = vunpack.c.h.b16 %v282
  %v450 = vunpack.c.l.b16 %v283
  %v451 = vunpack.c.h.b16 %v283
  %v452 = vunpack.c.l.b16 %v284
  %v453 = vunpack.c.h.b16 %v284
  %v454 = vunpack.c.l.b16 %v285
  %v455 = vunpack.c.h.b16 %v285
  %v456 = vunpack.c.l.b16 %v286
  %v457 = vunpack.c.h.b16 %v286
  %v458 = vunpack.c.l.b16 %v287
  %v459 = vunpack.c.h.b16 %v287
  %v460 = vunpack.c.l.b16 %v288
  %v461 = vunpack.c.h.b16 %v288
  %v462 = vunpack.c.l.b16 %v289
  %v463 = vunpack.c.h.b16 %v289
  %v464 = vunpack.c.l.b16 %v290
  %v465 = vunpack.c.h.b16 %v290
  %v466 = vunpack.c.l.b16 %v291
  %v467 = vunpack.c.h.b16 %v291
  %v468 = vunpack.c.l.b16 %v292
  %v469 = vunpack.c.h.b16 %v292
  %v470 = vunpack.c.l.b16 %v293
  %v471 = vunpack.c.h.b16 %v293
  %v472 = vunpack.c.l.b16 %v294
  %v473 = vunpack.c.h.b16 %v294
  %v474 = vunpack.c.l.b16 %v295
  %v475 = vunpack.c.h.b16 %v295
  %v476 = vunpack.c.l.b16 %v296
  %v477 = vunpack.c.h.b16 %v296
  %v478 = vunpack.c.l.b16 %v297
  %v479 = vunpack.c.h.b16 %v297
  %v480 = vunpack.c.l.b16 %v298
  %v481 = vunpack.c.h.b16 %v298
  %v482 = vunpack.c.l.b16 %v299
  %v483 = vunpack.c.h.b16 %v299
  %v484 = vunpack.c.l.b16 %v300
  %v485 = vunpack.c.h.b16 %v300
  %v486 = vunpack.c.l.b16 %v301
  %v487 = vunpack.c.h.b16 %v301
  %v488 = vunpack.c.l.b16 %v302
  %v489 = vunpack.c.h.b16 %v302
  %v490 = vunpack.c.l.b16 %v303
  %v491 = vunpack.c.h.b16 %v303
  %v492 = vunpack.c.l.b16 %v304
  %v493 = vunpack.c.h.b16 %v304
  %v494 = vunpack.c.l.b16 %v305
  %v495 = vunpack.c.h.b16 %v305
  %v496 = vunpack.c.l.b16 %v306
  %v497 = vunpack.c.h.b16 %v306
  %v498 = vunpack.c.l.b16 %v307
  %v499 = vunpack.c.h.b16 %v307
  %v500 = vunpack.c.l.b16 %v308
  %v501 = vunpack.c.h.b16 %v308
  %v502 = vunpack.c.l.b16 %v309
  %v503 = vunpack.c.h.b16 %v309
  %v504 = vunpack.c.l.b16 %v310
  %v505 = vunpack.c.h.b16 %v310
  %v506 = vunpack.c.l.b16 %v311
  %v507 = vunpack.c.h.b16 %v311
  %v508 = vunpack.c.l.b16 %v312
  %v509 = vunpack.c.h.b16 %v312
  %v510 = vunpack.c.l.b16 %v313
  %v511 = vunpack.c.h.b16 %v313
  %v512 = vunpack.c.l.b16 %v314
  %v513 = vunpack.c.h.b16 %v314
  %v514 = vunpack.c.l.b16 %v315
  %v515 = vunpack.c.h.b16 %v315
  %v516 = vunpack.c.l.b16 %v316
  %v517 = vunpack.c.h.b16 %v316
  %v518 = vunpack.c.l.b16 %v317
  %v519 = vunpack.c.h.b16 %v317
  %v520 = vunpack.c.l.b16 %v318
  %v521 = vunpack.c.h.b16 %v318
  %v522 = vunpack.c.l.b16 %v319
  %v523 = vunpack.c.h.b16 %v319
  %v524 = vpack.c.b16 %v398, %v396
  %v525 = vpack.c.b16 %v399, %v397
  %v526 = vpack.c.b16 %v402, %v400
  %v527 = vpack.c.b16 %v403, %v401
  %v528 = vpack.c.b16 %v406, %v404
  %v529 = vpack.c.b16 %v407, %v405
  %v530 = vpack.c.b16 %v410, %v408
  %v531 = vpack.c.b16 %v411, %v409
  %v532 = vpack.c.b16 %v414, %v412
  %v533 = vpack.c.b16 %v415, %v413
  %v534 = vpack.c.b16 %v418, %v416
  %v535 = vpack.c.b16 %v419, %v417
  %v536 = vpack.c.b16 %v422, %v420
  %v537 = vpack.c.b16 %v423, %v421
  %v538 = vpack.c.b16 %v426, %v424
  %v539 = vpack.c.b16 %v427, %v425
  %v540 = vpack.c.b16 %v430, %v428
  %v541 = vpack.c.b16 %v431, %v429
  %v542 = vpack.c.b16 %v434, %v432
  %v543 = vpack.c.b16 %v435, %v433
  %v544 = vpack.c.b16 %v438, %v436
  %v545 = vpack.c.b16 %v439, %v437
  %v546 = vpack.c.b16 %v442, %v440
  %v547 = vpack.c.b16 %v443, %v441
  %v548 = vpack.c.b16 %v446, %v444
  %v549 = vpack.c.b16 %v447, %v445
  %v550 = vpack.c.b16 %v450, %v448
  %v551 = vpack.c.b16 %v451, %v449
  %v552 = vpack.c.b16 %v454, %v452
  %v553 = vpack.c.b16 %v455, %v453
  %v554 = vpack.c.b16 %v458, %v456
  %v555 = vpack.c.b16 %v459, %v457
  %v556 = vpack.c.b16 %v462, %v460
  %v557 = vpack.c.b16 %v463, %v461
  %v558 = vpack.c.b16 %v466, %v464
  %v559 = vpack.c.b16 %v467, %v465
  %v560 = vpack.c.b16 %v470, %v468
  %v561 = vpack.c.b16 %v471, %v469
  %v562 = vpack.c.b16 %v474, %v472
  %v563 = vpack.c.b16 %v475, %v473
  %v564 = vpack.c.b16 %v478, %v476
  %v565 = vpack.c.b16 %v479, %v477
  %v566 = vpack.c.b16 %v482, %v480
  %v567 = vpack.c.b16 %v483, %v481
  %v568 = vpack.c.b16 %v486, %v484
  %v569 = vpack.c.b16 %v487, %v485
  %v570 = vpack.c.b16 %v490, %v488
  %v571 = vpack.c.b16 %v491, %v489
  %v572 = vpack.c.b16 %v494, %v492
  %v573 = vpack.c.b16 %v495, %v493
  %v574 = vpack.c.b16 %v498, %v496
  %v575 = vpack.c.b16 %v499, %v497
  %v576 = vpack.c.b16 %v502, %v500
  %v577 = vpack.c.b16 %v503, %v501
  %v578 = vpack.c.b16 %v506, %v504
  %v579 = vpack.c.b16 %v507, %v505
  %v580 = vpack.c.b16 %v510, %v508
  %v581 = vpack.c.b16 %v511, %v509
  %v582 = vpack.c.b16 %v514, %v512
  %v583 = vpack.c.b16 %v515, %v513
  %v584 = vpack.c.b16 %v518, %v516
  %v585 = vpack.c.b16 %v519, %v517
  %v586 = vpack.c.b16 %v522, %v520
  %v587 = vpack.c.b16 %v523, %v521
  %652 = vmatprep.subr.bf16.mxu0 %v539
  %653 = vmatpush1.bf16.msra.mxu0 %v538
  %654 = vmatprep.subr.bf16.mxu0 %v537
  %655 = vmatpush1.bf16.msra.mxu0 %v536
  %656 = vmatprep.subr.bf16.mxu0 %v535
  %657 = vmatpush1.bf16.msra.mxu0 %v534
  %658 = vmatprep.subr.bf16.mxu0 %v533
  %659 = vmatpush1.bf16.msra.mxu0 %v532
  %660 = vmatprep.subr.bf16.mxu0 %v531
  %661 = vmatpush1.bf16.msra.mxu0 %v530
  %662 = vmatprep.subr.bf16.mxu0 %v529
  %663 = vmatpush1.bf16.msra.mxu0 %v528
  %664 = vmatprep.subr.bf16.mxu0 %v527
  %665 = vmatpush1.bf16.msra.mxu0 %v526
  %666 = vmatprep.subr.bf16.mxu0 %v525
  %667 = vmatpush1.bf16.msra.mxu0 %v524
  %668 = vmatprep.subr.bf16.mxu0 %v555
  %669 = vmatpush2.bf16.msra.mxu0 %v554
  %670 = vmatprep.subr.bf16.mxu0 %v553
  %671 = vmatpush2.bf16.msra.mxu0 %v552
  %672 = vmatprep.subr.bf16.mxu0 %v551
  %673 = vmatpush2.bf16.msra.mxu0 %v550
  %674 = vmatprep.subr.bf16.mxu0 %v549
  %675 = vmatpush2.bf16.msra.mxu0 %v548
  %676 = vmatprep.subr.bf16.mxu0 %v547
  %677 = vmatpush2.bf16.msra.mxu0 %v546
  %678 = vmatprep.subr.bf16.mxu0 %v545
  %679 = vmatpush2.bf16.msra.mxu0 %v544
  %680 = vmatprep.subr.bf16.mxu0 %v543
  %681 = vmatpush2.bf16.msra.mxu0 %v542
  %682 = vmatprep.subr.bf16.mxu0 %v541
  %683 = vmatpush2.bf16.msra.mxu0 %v540
  %684 = vmatprep.mubr.bf16.mxu0 %v253
  %685 = vmatmul.mubr.bf16.gmra.mxu0 %v252
  %v686 = vpop.f32.mrf.mxu0
  %v687 = vadd.f32 %v325, %v686
  %v688 = vpop.f32.mrf.mxu0
  %v689 = vadd.f32 %v329, %v688
  %v690 = vpop.f32.mrf.mxu0
  %v691 = vpop.f32.mrf.mxu0
  %692 = vdwg.mxu0
  %693 = vmatprep.subr.bf16.mxu0 %v571
  %694 = vmatpush1.bf16.msra.mxu0 %v570
  %695 = vmatprep.subr.bf16.mxu0 %v569
  %696 = vmatpush1.bf16.msra.mxu0 %v568
  %697 = vmatprep.subr.bf16.mxu0 %v567
  %698 = vmatpush1.bf16.msra.mxu0 %v566
  %699 = vmatprep.subr.bf16.mxu0 %v565
  %700 = vmatpush1.bf16.msra.mxu0 %v564
  %701 = vmatprep.subr.bf16.mxu0 %v563
  %702 = vmatpush1.bf16.msra.mxu0 %v562
  %703 = vmatprep.subr.bf16.mxu0 %v561
  %704 = vmatpush1.bf16.msra.mxu0 %v560
  %705 = vmatprep.subr.bf16.mxu0 %v559
  %706 = vmatpush1.bf16.msra.mxu0 %v558
  %707 = vmatprep.subr.bf16.mxu0 %v557
  %708 = vmatpush1.bf16.msra.mxu0 %v556
  %709 = vmatprep.subr.bf16.mxu0 %v587
  %710 = vmatpush2.bf16.msra.mxu0 %v586
  %711 = vmatprep.subr.bf16.mxu0 %v585
  %712 = vmatpush2.bf16.msra.mxu0 %v584
  %713 = vmatprep.subr.bf16.mxu0 %v583
  %714 = vmatpush2.bf16.msra.mxu0 %v582
  %715 = vmatprep.subr.bf16.mxu0 %v581
  %716 = vmatpush2.bf16.msra.mxu0 %v580
  %717 = vmatprep.subr.bf16.mxu0 %v579
  %718 = vmatpush2.bf16.msra.mxu0 %v578
  %719 = vmatprep.subr.bf16.mxu0 %v577
  %720 = vmatpush2.bf16.msra.mxu0 %v576
  %721 = vmatprep.subr.bf16.mxu0 %v575
  %722 = vmatpush2.bf16.msra.mxu0 %v574
  %723 = vmatprep.subr.bf16.mxu0 %v573
  %724 = vmatpush2.bf16.msra.mxu0 %v572
  %725 = vmatprep.mubr.bf16.mxu0 %v255
  %726 = vmatmul.mubr.bf16.gmra.mxu0 %v254
  %v727 = vpop.f32.mrf.mxu0
  %v728 = vadd.f32 %v687, %v727
  %v729 = vpop.f32.mrf.mxu0
  %v730 = vadd.f32 %v689, %v729
  %v731 = vpop.f32.mrf.mxu0
  %v732 = vpop.f32.mrf.mxu0
  %733 = vdwg.mxu0
  %vm734 = vcmp.ge.f32.partialorder %v728, 0.0
  %vm735 = vcmp.ge.f32.partialorder %v730, 0.0
  %v736 = vmul.f32 %v728, 0.2
  %v737 = vmul.f32 %v730, 0.2
  %v738 = vsel %vm734, %v728, %v736
  %v739 = vsel %vm735, %v730, %v737
  %v740 = vpack.c.bf16 %v738, %v738
  %v741 = vpack.c.bf16 %v739, %v739
  %v742 = vld [vmem:[%s5] sm:$0xf]
  %v743 = vld [vmem:[%s5 + $0x4] sm:$0xf]
  %v744 = vld [vmem:[%s5 + $0x8] sm:$0xf]
  %v745 = vld [vmem:[%s5 + $0xc] sm:$0xf]
  %v746 = vld [vmem:[%s5 + $0x10] sm:$0xf]
  %v747 = vld [vmem:[%s5 + $0x14] sm:$0xf]
  %v748 = vld [vmem:[%s5 + $0x18] sm:$0xf]
  %v749 = vld [vmem:[%s5 + $0x1c] sm:$0xf]
  %v750 = vld [vmem:[%s5 + $0x20] sm:$0xf]
  %v751 = vld [vmem:[%s5 + $0x24] sm:$0xf]
  %v752 = vld [vmem:[%s5 + $0x28] sm:$0xf]
  %v753 = vld [vmem:[%s5 + $0x2c] sm:$0xf]
  %v754 = vld [vmem:[%s5 + $0x30] sm:$0xf]
  %v755 = vld [vmem:[%s5 + $0x34] sm:$0xf]
  %v756 = vld [vmem:[%s5 + $0x38] sm:$0xf]
  %v757 = vld [vmem:[%s5 + $0x3c] sm:$0xf]
  %v758 = vld [vmem:[%s5 + $0x40] sm:$0xf]
  %v759 = vld [vmem:[%s5 + $0x44] sm:$0xf]
  %v760 = vld [vmem:[%s5 + $0x48] sm:$0xf]
  %v761 = vld [vmem:[%s5 + $0x4c] sm:$0xf]
  %v762 = vld [vmem:[%s5 + $0x50] sm:$0xf]
  %v763 = vld [vmem:[%s5 + $0x54] sm:$0xf]
  %v764 = vld [vmem:[%s5 + $0x58] sm:$0xf]
  %v765 = vld [vmem:[%s5 + $0x5c] sm:$0xf]
  %v766 = vld [vmem:[%s5 + $0x60] sm:$0xf]
  %v767 = vld [vmem:[%s5 + $0x64] sm:$0xf]
  %v768 = vld [vmem:[%s5 + $0x68] sm:$0xf]
  %v769 = vld [vmem:[%s5 + $0x6c] sm:$0xf]
  %v770 = vld [vmem:[%s5 + $0x70] sm:$0xf]
  %v771 = vld [vmem:[%s5 + $0x74] sm:$0xf]
  %v772 = vld [vmem:[%s5 + $0x78] sm:$0xf]
  %v773 = vld [vmem:[%s5 + $0x7c] sm:$0xf]
  %v774 = vld [vmem:[%s6] sm:$0x1]
  %v776 = vlaneseq
  %v777 = vshrl.u32 %v776, 7
  %v778 = vsub.s32 0, %v777
  %v779 = vrot.slane %v774, %v778
  %v813 = vunpack.c.l.b16 %v742
  %v814 = vunpack.c.l.b16 %v743
  %v815 = vunpack.c.l.b16 %v744
  %v816 = vunpack.c.l.b16 %v745
  %v817 = vunpack.c.l.b16 %v746
  %v818 = vunpack.c.l.b16 %v747
  %v819 = vunpack.c.l.b16 %v748
  %v820 = vunpack.c.l.b16 %v749
  %v821 = vunpack.c.l.b16 %v750
  %v822 = vunpack.c.l.b16 %v751
  %v823 = vunpack.c.l.b16 %v752
  %v824 = vunpack.c.l.b16 %v753
  %v825 = vunpack.c.l.b16 %v754
  %v826 = vunpack.c.l.b16 %v755
  %v827 = vunpack.c.l.b16 %v756
  %v828 = vunpack.c.l.b16 %v757
  %v829 = vunpack.c.l.b16 %v758
  %v830 = vunpack.c.l.b16 %v759
  %v831 = vunpack.c.l.b16 %v760
  %v832 = vunpack.c.l.b16 %v761
  %v833 = vunpack.c.l.b16 %v762
  %v834 = vunpack.c.l.b16 %v763
  %v835 = vunpack.c.l.b16 %v764
  %v836 = vunpack.c.l.b16 %v765
  %v837 = vunpack.c.l.b16 %v766
  %v838 = vunpack.c.l.b16 %v767
  %v839 = vunpack.c.l.b16 %v768
  %v840 = vunpack.c.l.b16 %v769
  %v841 = vunpack.c.l.b16 %v770
  %v842 = vunpack.c.l.b16 %v771
  %v843 = vunpack.c.l.b16 %v772
  %v844 = vunpack.c.l.b16 %v773
  %v845 = vpack.c.b16 %v814, %v813
  %v846 = vpack.c.b16 %v816, %v815
  %v847 = vpack.c.b16 %v818, %v817
  %v848 = vpack.c.b16 %v820, %v819
  %v849 = vpack.c.b16 %v822, %v821
  %v850 = vpack.c.b16 %v824, %v823
  %v851 = vpack.c.b16 %v826, %v825
  %v852 = vpack.c.b16 %v828, %v827
  %v853 = vpack.c.b16 %v830, %v829
  %v854 = vpack.c.b16 %v832, %v831
  %v855 = vpack.c.b16 %v834, %v833
  %v856 = vpack.c.b16 %v836, %v835
  %v857 = vpack.c.b16 %v838, %v837
  %v858 = vpack.c.b16 %v840, %v839
  %v859 = vpack.c.b16 %v842, %v841
  %v860 = vpack.c.b16 %v844, %v843
  %877 = vmatprep.subr.bf16.mxu0 0
  %878 = vmatpush1.bf16.msra.mxu0 %v852
  %879 = vmatprep.subr.bf16.mxu0 0
  %880 = vmatpush1.bf16.msra.mxu0 %v851
  %881 = vmatprep.subr.bf16.mxu0 0
  %882 = vmatpush1.bf16.msra.mxu0 %v850
  %883 = vmatprep.subr.bf16.mxu0 0
  %884 = vmatpush1.bf16.msra.mxu0 %v849
  %885 = vmatprep.subr.bf16.mxu0 0
  %886 = vmatpush1.bf16.msra.mxu0 %v848
  %887 = vmatprep.subr.bf16.mxu0 0
  %888 = vmatpush1.bf16.msra.mxu0 %v847
  %889 = vmatprep.subr.bf16.mxu0 0
  %890 = vmatpush1.bf16.msra.mxu0 %v846
  %891 = vmatprep.subr.bf16.mxu0 0
  %892 = vmatpush1.bf16.msra.mxu0 %v845
  %893 = vmatprep.subr.bf16.mxu0 0
  %894 = vmatpush2.bf16.msra.mxu0 %v860
  %895 = vmatprep.subr.bf16.mxu0 0
  %896 = vmatpush2.bf16.msra.mxu0 %v859
  %897 = vmatprep.subr.bf16.mxu0 0
  %898 = vmatpush2.bf16.msra.mxu0 %v858
  %899 = vmatprep.subr.bf16.mxu0 0
  %900 = vmatpush2.bf16.msra.mxu0 %v857
  %901 = vmatprep.subr.bf16.mxu0 0
  %902 = vmatpush2.bf16.msra.mxu0 %v856
  %903 = vmatprep.subr.bf16.mxu0 0
  %904 = vmatpush2.bf16.msra.mxu0 %v855
  %905 = vmatprep.subr.bf16.mxu0 0
  %906 = vmatpush2.bf16.msra.mxu0 %v854
  %907 = vmatprep.subr.bf16.mxu0 0
  %908 = vmatpush2.bf16.msra.mxu0 %v853
  %909 = vmatprep.mubr.bf16.mxu0 %v741
  %910 = vmatmul.mubr.bf16.gmra.mxu0 %v740
  %v911 = vpop.f32.mrf.mxu0
  %v912 = vadd.f32 %v779, %v911
  %v913 = vpop.f32.mrf.mxu0
  %v914 = vpop.f32.mrf.mxu0
  %v915 = vpop.f32.mrf.mxu0
  %916 = vdwg.mxu0
  %vm917 = vcmp.ge.f32.partialorder %v912, 0.0
  %v918 = vmul.f32 %v912, 0.2
  %v919 = vsel %vm917, %v912, %v918
  %v920 = vld [vmem:[%s7] sm:$0x1]
  %v922 = vlaneseq
  %v923 = vshrl.u32 %v922, 7
  %v924 = vsub.s32 0, %v923
  %v925 = vrot.slane %v920, %v924
  %v927 = vmul.f32 %v919, %v925
  %928 = vadd.xlane.f32.xlu0 %v927
  %v929 = vpop.xlane.xlu0 %928
  %v930 = vld [vmem:[#allocation2] sm:$0x1]
  %v932 = vlaneseq
  %v933 = vshrl.u32 %v932, 7
  %v934 = vsub.s32 0, %v933
  %v935 = vrot.slane %v930, %v934
  %v937 = vadd.f32 %v929, %v935
  %vm938 = vcmask 7168
  %939 = vst.msk [vmem:[%s9] sm:$0xff] %vm938, %v937
  // Predicated region
  $region38: #{id_discriminator_firsthalf.1} parent=0 // pred_check
    _
  $region39: #{id_discriminator_firsthalf.1} parent=0 // pred_check_branch
    %941 = sbr.rel (0) target = $region41
  $region40: #{id_discriminator_firsthalf.1} parent=0 // pred_region
    _
  $region41: #{id_discriminator_firsthalf.1} parent=0 // pred_fallthru
    _
  // Predicated region
  $region42: #{id_discriminator_firsthalf.1} parent=0 // pred_check
    _
  $region43: #{id_discriminator_firsthalf.1} parent=0 // pred_check_branch
    %943 = sbr.rel (0) target = $region45
  $region44: #{id_discriminator_firsthalf.1} parent=0 // pred_region
    _
  $region45: #{id_discriminator_firsthalf.1} parent=0 // pred_fallthru
    _

</llo_original>
